<compile_context>
chip_gen: v5e
topology: v5e:2x2
jax: 0.10.0
libtpu: 0.0.40
codegen_flags: <defaults>
</compile_context>

<pallas_src>
import jax
import jax.numpy as jnp
from jax.experimental import pallas as pl
from jax.experimental.pallas import tpu as pltpu


def _copy_kernel(x_ref, o_ref):
    # forward() of GeneratedImage: materialize the stored image parameter.
    o_ref[...] = x_ref[...]


# Below this size a bare `return weight` beats any kernel launch + DMA setup.
_KERNEL_MIN_BYTES = 1 << 20  # 1 MiB
# Per-block cap: 2 MiB block => ~8 MiB live VMEM with in+out double buffering,
# safe on every generation (v5e/v6e 128 MiB, v7x 64 MiB phys / 32 MiB scoped).
_MAX_TILE_BYTES = 2 * 1024 * 1024


def _choose_lane_layout(total: int):
    """Pick a lane-dense flat (rows, lane_width) view, lane_width % 128 == 0."""
    for lane_w in (1024, 512, 256, 128):
        if total % lane_w == 0:
            return total // lane_w, lane_w
    return None


def _choose_tile_rows(rows: int, lane_w: int, itemsize: int) -> int:
    if rows <= 8 or rows % 8 != 0:
        # Full-extent row block (always legal); only hit for tiny/odd shapes.
        return rows
    max_rows = max(8, _MAX_TILE_BYTES // (lane_w * itemsize))
    best = 8
    t = 8
    while t <= rows and t <= max_rows:
        if rows % t == 0:
            best = t
        t += 8
    return best


def _pallas_identity_2d(x2d: jax.Array, tile_rows: int) -> jax.Array:
    rows, lane_w = x2d.shape
    grid = (rows // tile_rows,)
    return pl.pallas_call(
        _copy_kernel,
        out_shape=jax.ShapeDtypeStruct((rows, lane_w), x2d.dtype),
        grid=grid,
        in_specs=[pl.BlockSpec((tile_rows, lane_w), lambda i: (i, 0))],
        out_specs=pl.BlockSpec((tile_rows, lane_w), lambda i: (i, 0)),
        input_output_aliases={0: 0},
        compiler_params=pltpu.CompilerParams(
            dimension_semantics=("parallel",),
        ),
    )(x2d)


def _pallas_identity_full(x: jax.Array) -> jax.Array:
    # Fallback when no lane-dense flat view exists (size not a multiple of 128):
    # single full-extent block (legal because dims equal the full array dims).
    ndim = x.ndim
    return pl.pallas_call(
        _copy_kernel,
        out_shape=jax.ShapeDtypeStruct(x.shape, x.dtype),
        grid=(1,),
        in_specs=[pl.BlockSpec(x.shape, lambda i: (0,) * ndim)],
        out_specs=pl.BlockSpec(x.shape, lambda i: (0,) * ndim),
        input_output_aliases={0: 0},
        compiler_params=pltpu.CompilerParams(
            dimension_semantics=("arbitrary",),
        ),
    )(x)


def generated_image_forward(weight: jax.Array, *, force_kernel: bool = False) -> jax.Array:
    """Pallas equivalent of GeneratedImage.forward(): returns the image param."""
    nbytes = weight.size * weight.dtype.itemsize
    if not force_kernel and nbytes < _KERNEL_MIN_BYTES:
        # Identity forward: any data movement is pure overhead at this size.
        return weight
    layout = _choose_lane_layout(weight.size)
    if layout is None:
        return _pallas_identity_full(weight)
    rows, lane_w = layout
    tile_rows = _choose_tile_rows(rows, lane_w, weight.dtype.itemsize)
    y2d = _pallas_identity_2d(weight.reshape(rows, lane_w), tile_rows)
    return y2d.reshape(weight.shape)


class GeneratedImage:
    """Thin wrapper mirroring the PyTorch module's interface."""

    def __init__(self, img_shape, key):
        # torch.rand(*img_shape) -> uniform [0, 1)
        self.weight = jax.random.uniform(key, img_shape, dtype=jnp.float32)

    def forward(self, *, force_kernel: bool = False):
        return generated_image_forward(self.weight, force_kernel=force_kernel)

    __call__ = forward


if __name__ == "__main__":
    key = jax.random.PRNGKey(0)

    # Small NCHW shape consistent with the module; force the kernel path so
    # the Pallas code is exercised even below the dispatch threshold.
    img_shape = (2, 4, 16, 16)
    model = GeneratedImage(img_shape, key)
    out = jax.block_until_ready(model(force_kernel=True))
    assert out.shape == img_shape and out.dtype == jnp.float32
    assert bool(jnp.array_equal(out, model.weight))

    # Larger image: exercises the tiled (grid > 1), lane-dense, parallel path.
    big_shape = (1, 4, 512, 512)
    big = GeneratedImage(big_shape, jax.random.PRNGKey(0))
    out_big = jax.block_until_ready(big())
    assert out_big.shape == big_shape and out_big.dtype == jnp.float32
    assert bool(jnp.array_equal(out_big, big.weight))

    print("KERNEL_OK")
</pallas_src>

<mosaic_0001>
module attributes {stable_mosaic.version = 11 : i64} {
  func.func @_copy_kernel(%arg0: i32, %arg1: memref<2x1024xf32, #tpu.memory_space<vmem>>, %arg2: memref<2x1024xf32, #tpu.memory_space<vmem>>) attributes {dimension_semantics = [#tpu.dimension_semantics<parallel>], iteration_bounds = array<i64: 1>, scalar_prefetch = 0 : i64, scratch_operands = 0 : i64, tpu.core_type = #tpu.core_type<tc>, window_params = [{transform_indices = @transform_0, window_bounds = array<i64: 2, 1024>}, {transform_indices = @transform_1, window_bounds = array<i64: 2, 1024>}]} {
    %c0 = arith.constant 0 : index
    %c0_0 = arith.constant 0 : index
    %0 = vector.load %arg1[%c0, %c0_0] : memref<2x1024xf32, #tpu.memory_space<vmem>>, vector<2x1024xf32>
    %c0_1 = arith.constant 0 : index
    %c0_2 = arith.constant 0 : index
    %1 = vector.load %arg2[%c0_1, %c0_2] : memref<2x1024xf32, #tpu.memory_space<vmem>>, vector<2x1024xf32>
    tpu.vector_store %arg2[%c0_1, %c0_2], %0 {strides = array<i32>} : memref<2x1024xf32, #tpu.memory_space<vmem>>, vector<2x1024xf32>,
    return
  }
  func.func @transform_0(%arg0: i32) -> (i32, i32) {
    %c0_i32 = arith.constant 0 : i32
    %c0_i32_0 = arith.constant 0 : i32
    return %arg0, %c0_i32 : i32, i32
  }
  func.func @transform_1(%arg0: i32) -> (i32, i32) {
    %c0_i32 = arith.constant 0 : i32
    %c0_i32_0 = arith.constant 0 : i32
    return %arg0, %c0_i32 : i32, i32
  }
}

</mosaic_0001>

<llo_original>
// kernel: tpu_custom_call.1
$region0: #{tpu_custom_call.1}
  #allocation0 [shape = 'u32[]', space=smem, size = 0x4, offset = 0x4, fixed_abs, tag = 'smem constant byte address 0x4 - core index']
  #allocation1 [shape = 'u32[72,128]{1,0:T(1,128)}', space=vmem, size = 0x9000, scoped, tag = 'internal scratch']
  %s0 = inlined_call_operand.hbm [shape: f32[2,1024], index: 0, kind: input, shape index: {}, may-alias: {0,1}]
  %s1 = inlined_call_operand.hbm [shape: f32[2,1024], index: 1, kind: output, shape index: {}, may-alias: {0,1}]
  %s2 = sld [smem:[#allocation0]]
  $region18: #{tpu_custom_call.1} parent=0
    _
  %s4 = ssub.s32 1, %s2
  %s5 = scalar_select 0, %s4, %s2
  $region1: #{tpu_custom_call.1} parent=0
    #allocation2 [shape = 'u8[8192]{0}', space=vmem, size = 0x2000, scoped, tag = 'input window, operand 0, single buffered']
    #allocation3 [shape = 's32[1]{0}', space=sflag, size = 0x4, scoped, tag = 'scoped memory for tpu_custom_call.1']
    #allocation4 [shape = 's32[1]{0}', space=sflag, size = 0x4, scoped, tag = 'scoped memory for tpu_custom_call.1']
    #allocation5 [shape = 'u8[8192]{0}', space=vmem, size = 0x2000, scoped, tag = 'output window, operand 0, single buffered']
    %6 = vsyncpa [#allocation3], 0
    %7 = vsyncpa [#allocation4], 0
    // Predicated region
    $region2: #{tpu_custom_call.1} parent=1 // pred_check
      _
    $region3: #{tpu_custom_call.1} parent=1 // pred_check_branch
      %9 = sbr.rel (0) target = $region5
    $region4: #{tpu_custom_call.1} parent=1 // pred_region
      %11 = vsyncadd [#allocation3], 0
      %s13 = sshll.u32 %s0, 4
      %s14 = int_to_ptr.hbm [resolvable:$true] %s13
      %s15 = sshll.u32 [#allocation2], 4
      %s16 = int_to_ptr.vmem [resolvable:$true] %s15
      %18 = dma.hbm_to_vmem [thread:$0]  %s14, 256, %s16, [#allocation3]
    $region5: #{tpu_custom_call.1} parent=1 // pred_fallthru
      _
    // Predicated region
    $region6: #{tpu_custom_call.1} parent=1 // pred_check
      _
    $region7: #{tpu_custom_call.1} parent=1 // pred_check_branch
      %20 = sbr.rel (0) target = $region9
    $region8: #{tpu_custom_call.1} parent=1 // pred_region
      %22 = dma.done [#allocation3], 256
    $region9: #{tpu_custom_call.1} parent=1 // pred_fallthru
      _
    %v23 = vld [vmem:[#allocation2] sm:$0xff]
    %v24 = vld [vmem:[#allocation2 + $0x8] sm:$0xff]
    %25 = vst [vmem:[#allocation5] sm:$0xff] %v23
    %26 = vst [vmem:[#allocation5 + $0x8] sm:$0xff] %v24
    // Predicated region
    $region10: #{tpu_custom_call.1} parent=1 // pred_check
      _
    $region11: #{tpu_custom_call.1} parent=1 // pred_check_branch
      %28 = sbr.rel (0) target = $region13
    $region12: #{tpu_custom_call.1} parent=1 // pred_region
      %30 = vsyncadd [#allocation4], 0
      %s32 = sshll.u32 [#allocation5], 4
      %s33 = int_to_ptr.vmem [resolvable:$true] %s32
      %s34 = sshll.u32 %s1, 4
      %s35 = int_to_ptr.hbm [resolvable:$true] %s34
      %37 = dma.vmem_to_hbm [thread:$0]  %s33, 256, %s35, [#allocation4]
    $region13: #{tpu_custom_call.1} parent=1 // pred_fallthru
      _
    // Predicated region
    $region14: #{tpu_custom_call.1} parent=1 // pred_check
      _
    $region15: #{tpu_custom_call.1} parent=1 // pred_check_branch
      %39 = sbr.rel (0) target = $region17
    $region16: #{tpu_custom_call.1} parent=1 // pred_region
      %41 = dma.done [#allocation4], 256
    $region17: #{tpu_custom_call.1} parent=1 // pred_fallthru
      _
    %42 = vsyncpa [#allocation3], 1
    %43 = vsyncpa [#allocation4], 1

</llo_original>
